<compile_context>
chip_gen: v5e
topology: v5e:2x2
jax: 0.10.0
libtpu: 0.0.40
codegen_flags: <defaults>
</compile_context>

<pallas_src>
import functools
import math

import jax
import jax.numpy as jnp
from jax.experimental import pallas as pl
from jax.experimental.pallas import tpu as pltpu

_MIN_CHUNK_BYTES = 1 << 20   # keep each DMA chunk >= 1 MiB so per-grid-step
                             # overhead (~0.35 us) is noise vs. the DMA itself


def _flatten_dma_kernel(x_hbm, o_hbm, sem):
    # One contiguous chunk per grid step, copied HBM -> HBM (no VMEM bounce).
    i = pl.program_id(0)
    cp = pltpu.make_async_copy(x_hbm.at[i], o_hbm.at[i], sem)
    cp.start()
    cp.wait()


def _num_chunks(total: int, itemsize: int) -> int:
    # >= 2 chunks lets both v7x TensorCores issue DMAs (neutral on v5e/v6e);
    # small tensors fall back to a single whole-buffer DMA.
    for c in (8, 4, 2):
        if total % c == 0 and (total // c) * itemsize >= _MIN_CHUNK_BYTES:
            return c
    return 1


@functools.partial(jax.jit, static_argnames=("use_kernel",))
def flatten(x: jax.Array, use_kernel: bool = True) -> jax.Array:
    """Equivalent of PyTorch `x.view(x.size(0), -1)`."""
    n = x.shape[0]
    d = math.prod(x.shape[1:]) if x.ndim > 1 else 1

    if not use_kernel:
        # Fastest path: Flatten is metadata-only, zero HBM traffic.
        return jnp.reshape(x, (n, d))

    total = n * d
    itemsize = jnp.dtype(x.dtype).itemsize
    num_chunks = _num_chunks(total, itemsize)
    chunk = total // num_chunks

    # Metadata-only reshape under jit; no padding is ever needed because the
    # HBM -> HBM DMA has no (8,128) block-shape constraint.
    x_flat = jnp.reshape(x, (num_chunks, chunk))

    out = pl.pallas_call(
        _flatten_dma_kernel,
        out_shape=jax.ShapeDtypeStruct((num_chunks, chunk), x.dtype),
        grid_spec=pltpu.PrefetchScalarGridSpec(
            num_scalar_prefetch=0,
            grid=(num_chunks,),
            in_specs=[pl.BlockSpec(memory_space=pl.ANY)],   # raw HBM ref
            out_specs=pl.BlockSpec(memory_space=pl.ANY),    # raw HBM ref
            scratch_shapes=[pltpu.SemaphoreType.DMA],
        ),
        compiler_params=pltpu.CompilerParams(
            # Disjoint chunks per grid step -> safe to shard across v7x's 2 TCs.
            dimension_semantics=("parallel",),
        ),
        cost_estimate=pl.CostEstimate(
            flops=0,
            transcendentals=0,
            bytes_accessed=2 * total * itemsize,   # pure memory traffic
        ),
    )(x_flat)

    return jnp.reshape(out, (n, d))


if __name__ == "__main__":
    key = jax.random.PRNGKey(0)
    # Small NCHW input consistent with the module's usage in a conv test.
    x = jax.random.normal(key, (2, 4, 16, 16), dtype=jnp.float32)

    y = flatten(x)                      # kernel (DMA-copy) path
    y = jax.block_until_ready(y)

    # Reference check against the pure-JAX flatten (== torch .view(N, -1)).
    y_ref = jnp.reshape(x, (x.shape[0], -1))
    assert y.shape == (2, 4 * 16 * 16), y.shape
    assert y.dtype == x.dtype
    assert bool(jnp.array_equal(y, y_ref))

    print("KERNEL_OK")
</pallas_src>

<mosaic_0001>
module attributes {stable_mosaic.version = 11 : i64} {
  func.func @_flatten_dma_kernel(%arg0: i32, %arg1: memref<1x2048xf32, #tpu.memory_space<any>>, %arg2: memref<1x2048xf32, #tpu.memory_space<any>>, %arg3: memref<!tpu.dma_semaphore, #tpu.memory_space<semaphore_mem>>) attributes {dimension_semantics = [#tpu.dimension_semantics<parallel>], iteration_bounds = array<i64: 1>, scalar_prefetch = 0 : i64, scratch_operands = 1 : i64, tpu.core_type = #tpu.core_type<tc>, window_params = [{}, {}]} {
    %c0_i32 = arith.constant 0 : i32
    %0 = tpu.memref_slice %arg1[%arg0, %c0_i32] : memref<1x2048xf32, #tpu.memory_space<any>> -> memref<1x2048xf32, #tpu.memory_space<any>>
    %1 = tpu.memref_squeeze %0 : memref<1x2048xf32, #tpu.memory_space<any>> -> memref<2048xf32, #tpu.memory_space<any>>
    %c0_i32_0 = arith.constant 0 : i32
    %2 = tpu.memref_slice %arg2[%arg0, %c0_i32_0] : memref<1x2048xf32, #tpu.memory_space<any>> -> memref<1x2048xf32, #tpu.memory_space<any>>
    %3 = tpu.memref_squeeze %2 : memref<1x2048xf32, #tpu.memory_space<any>> -> memref<2048xf32, #tpu.memory_space<any>>
    tpu.enqueue_dma source(%1 : memref<2048xf32, #tpu.memory_space<any>>) target(%3 : memref<2048xf32, #tpu.memory_space<any>>) target_semaphore(%arg3 : memref<!tpu.dma_semaphore, #tpu.memory_space<semaphore_mem>>)
    %c0_i32_1 = arith.constant 0 : i32
    %4 = tpu.memref_slice %arg1[%arg0, %c0_i32_1] : memref<1x2048xf32, #tpu.memory_space<any>> -> memref<1x2048xf32, #tpu.memory_space<any>>
    %5 = tpu.memref_squeeze %4 : memref<1x2048xf32, #tpu.memory_space<any>> -> memref<2048xf32, #tpu.memory_space<any>>
    %c0_i32_2 = arith.constant 0 : i32
    %6 = tpu.memref_slice %arg2[%arg0, %c0_i32_2] : memref<1x2048xf32, #tpu.memory_space<any>> -> memref<1x2048xf32, #tpu.memory_space<any>>
    %7 = tpu.memref_squeeze %6 : memref<1x2048xf32, #tpu.memory_space<any>> -> memref<2048xf32, #tpu.memory_space<any>>
    tpu.wait_dma2 semaphore(%arg3 : memref<!tpu.dma_semaphore, #tpu.memory_space<semaphore_mem>>) src(%5 : memref<2048xf32, #tpu.memory_space<any>>) dst(%7 : memref<2048xf32, #tpu.memory_space<any>>)
    return
  }
}

</mosaic_0001>

<llo_original>
// kernel: flatten.1
$region0: #{flatten.1}
  #allocation0 [shape = 'u32[]', space=smem, size = 0x4, offset = 0x4, fixed_abs, tag = 'smem constant byte address 0x4 - core index']
  #allocation1 [shape = 'u32[72,128]{1,0:T(1,128)}', space=vmem, size = 0x9000, scoped, tag = 'internal scratch']
  #allocation2 [shape = 's32[1]{0}', space=sflag, size = 0x4, scoped, tag = 'scratch operand']
  #allocation3 [shape = 's32[]', space=sflag, size = 0x4, offset = 0, fixed_abs, tag = 'sflag constant byte address 0x0 - dummy sync flag']
  %s0 = inlined_call_operand.vmem [shape: f32[1,2048], index: 0, kind: input, shape index: {}]
  %s1 = inlined_call_operand.vmem [shape: f32[1,2048], index: 1, kind: output, shape index: {}]
  %s2 = sld [smem:[#allocation0]]
  $region21: #{flatten.1} parent=0
    _
  %s4 = ssub.s32 1, %s2
  %s5 = scalar_select 0, %s4, %s2
  %s6 = smul.u32 0, 16
  %s7 = scalar_lea.vmem %s0, %s6
  %s8 = scalar_lea.vmem %s1, %s6
  // Predicated region
  $region2: #{flatten.1} parent=0 // pred_check
    _
  $region3: #{flatten.1} parent=0 // pred_check_branch
    %10 = sbr.rel (0) target = $region5
  $region4: #{flatten.1} parent=0 // pred_region
    loop: start=0, step=1, limit=1
    $region6: #{flatten.1} parent=4 // loop_pre_header
      _
    $region7: #{flatten.1} parent=4 // loop_header
      %s12 = sphi 0, %s16
      %p13 = scmp.ge.s32.totalorder %s12, 1
      %s17 = sphi %s7, %s7
      %s18 = sphi %s8, %s8
    $region8: #{flatten.1} parent=4 // loop_header_branch
      %15 = sbr.rel (%p13) target = $region12
    $region9: #{flatten.1} parent=4 // loop_body
      %v19 = vld [vmem:[%s17] sm:$0xff]
      %20 = vst [vmem:[%s18] sm:$0xff] %v19
      %v21 = vld [vmem:[%s17 + $0x8] sm:$0xff]
      %22 = vst [vmem:[%s18 + $0x8] sm:$0xff] %v21
    $region10: #{flatten.1} parent=4 // loop_footer
      %s16 = sadd.s32 1, %s12
    $region11: #{flatten.1} parent=4 // loop_footer_branch
      %11 = sbr.rel target = $region7
    $region12: #{flatten.1} parent=4 // loop_exit
      _
  $region5: #{flatten.1} parent=0 // pred_fallthru
    _
  // Predicated region
  $region13: #{flatten.1} parent=0 // pred_check
    _
  $region14: #{flatten.1} parent=0 // pred_check_branch
    %24 = sbr.rel target = $region16
  $region15: #{flatten.1} parent=0 // pred_region
    _
  $region16: #{flatten.1} parent=0 // pred_fallthru
    _
  // Predicated region
  $region17: #{flatten.1} parent=0 // pred_check
    _
  $region18: #{flatten.1} parent=0 // pred_check_branch
    %27 = sbr.rel (0) target = $region20
  $region19: #{flatten.1} parent=0 // pred_region
    %28 = vsyncadd [#allocation2], 256
  $region20: #{flatten.1} parent=0 // pred_fallthru
    _
  %30 = dma.done [#allocation2], 256
  %31 = vsyncmov [#allocation2]
  %s32 = vpop.sfrf %31
  %p33 = scmp.eq.s32.totalorder %s32, 0
  %p34 = pneg %p33
  %36 = shalt.err (%p34)

</llo_original>
